<compile_context>
chip_gen: v7x
topology: tpu7x:2x2x1
jax: 0.10.0
libtpu: 0.0.40
codegen_flags: <defaults>
</compile_context>

<pallas_src>
import jax
import jax.numpy as jnp
from jax.experimental import pallas as pl
from jax.experimental.pallas import tpu as pltpu

_LANES = 128
_SUBLANES = 8
_EPS = 1e-7


def _round_up(x, m):
    return ((x + m - 1) // m) * m


def _ontological_loss_kernel(
    scales_ref, nrows_ref,                         # SMEM scalar prefetch
    o11_ref, t11_ref, o21_ref, t21_ref, w1m1_ref,  # raw-logit BCE path
    o12_ref, t12_ref, o22_ref, t22_ref, w2_ref,    # probability BCE path
    e1_ref, e2_ref, pair_ref,                      # embeddings + distance target
    o_ref,                                         # (1, 1, 128) partial-sum tile
):
    f32 = jnp.float32
    s1 = scales_ref[0]                  # lambda1 / (B*C)
    s2 = scales_ref[1]                  # lambda2 / (B*C)
    s3 = scales_ref[2]                  # lambda3 / B
    n_valid = nrows_ref[0]              # true batch size B

    bt = o11_ref.shape[0]
    row0 = pl.program_id(0) * bt
    row_ids = jax.lax.broadcasted_iota(jnp.int32, (bt, 1), 0) + row0
    row_ok = row_ids < n_valid          # masks the ragged last block's OOB rows

    pw1_m1 = w1m1_ref[...].astype(f32)  # (pos_weight_1 - 1), precomputed on host
    pw2 = w2_ref[...].astype(f32)

    def bce_logits_sum(x_ref, y_ref):
        # pos-weighted BCE-with-logits, numerically stable softplus form
        x = x_ref[...].astype(f32)
        y = y_ref[...].astype(f32)
        sp = jnp.maximum(-x, 0.0) + jnp.log1p(jnp.exp(-jnp.abs(x)))
        bce = (1.0 - y) * x + (1.0 + pw1_m1 * y) * sp
        return jnp.sum(jnp.where(row_ok, bce, 0.0))

    def bce_probs_sum(p_ref, y_ref):
        # BCEWithLogits(-log(1/p - 1), y, pw) == -pw*y*log(p) - (1-y)*log(1-p)
        p = jnp.clip(p_ref[...].astype(f32), _EPS, 1.0 - _EPS)
        y = y_ref[...].astype(f32)
        bce = -(pw2 * y) * jnp.log(p) - (1.0 - y) * jnp.log1p(-p)
        return jnp.sum(jnp.where(row_ok, bce, 0.0))

    sum_logit = bce_logits_sum(o11_ref, t11_ref) + bce_logits_sum(o21_ref, t21_ref)
    sum_prob = bce_probs_sum(o12_ref, t12_ref) + bce_probs_sum(o22_ref, t22_ref)

    # ontological (embedding distance) term
    d = e1_ref[...].astype(f32) - e2_ref[...].astype(f32)
    dist = jnp.sqrt(jnp.sum(d * d, axis=1, keepdims=True))            # (bt, 1)
    dterm = (dist - pair_ref[...].astype(f32)) ** 2
    sum_dist = jnp.sum(jnp.where(row_ok, dterm, 0.0))

    partial = s1 * sum_logit + s2 * sum_prob + s3 * sum_dist

    # lane-dense output: every lane holds partial/128 so the wrapper reduces
    # with a plain jnp.sum over the whole (num_blocks, 1, 128) array.
    o_ref[...] = jnp.full(o_ref.shape, partial * (1.0 / 128.0), dtype=jnp.float32)


def _pick_batch_tile(batch, padded_row_bytes, max_rows=512,
                     vmem_budget=40 * 1024 * 1024):
    """Batch tile: multiple of 8, <= max_rows, >= 2 grid blocks whenever the
    batch allows (v7x megacore), shrunk until the double-buffered working set
    fits the VMEM budget.  B need NOT divide evenly: the cdiv grid plus the
    in-kernel row mask handles the ragged last block."""
    bt = min(max_rows, _round_up(batch, _SUBLANES))
    if batch > _SUBLANES:
        bt = min(bt, _round_up(pl.cdiv(batch, 2), _SUBLANES))
    bt = max(bt, _SUBLANES)
    while bt > _SUBLANES and 2 * bt * padded_row_bytes > vmem_budget:
        bt = max(_SUBLANES, _round_up(bt // 2, _SUBLANES))
    return bt


def ontological_loss(out, targets, pair_type,
                     lambda1, lambda2, lambda3, weights_1, weights_2):
    emb1, emb2, o11, o12, o21, o22 = out
    t11, t12, t21, t22 = targets

    B, C = o11.shape
    D = emb1.shape[1]

    # tiny (1, C) pos-weight rows; (pw - 1) hoisted out of the kernel
    w1m1 = jnp.asarray(weights_1, jnp.float32).reshape(1, C) - 1.0
    w2 = jnp.asarray(weights_2, jnp.float32).reshape(1, C)
    pair = jnp.reshape(jnp.asarray(pair_type, jnp.float32), (B, 1))

    # lambdas + mean denominators + true batch size go through SMEM scalar
    # prefetch (no Mosaic recompile when the loss weights change)
    scales = jnp.array([lambda1 / (B * C), lambda2 / (B * C), lambda3 / B],
                       jnp.float32)
    nrows = jnp.array([B], jnp.int32)

    # per-row VMEM footprint (Mosaic pads the last dim to 128 lanes)
    c_pad = _round_up(C, _LANES)
    d_pad = _round_up(D, _LANES)
    padded_row_bytes = (8 * c_pad + 2 * d_pad + _LANES) * 4

    bt = _pick_batch_tile(B, padded_row_bytes)
    num_blocks = pl.cdiv(B, bt)

    vmem_est = (2 * (bt * padded_row_bytes + 2 * c_pad * 4)
                + 2 * _SUBLANES * _LANES * 4 + (2 << 20))
    vmem_limit = int(min(48 * 1024 * 1024, max(vmem_est, 4 * 1024 * 1024)))

    row_spec = pl.BlockSpec((bt, C), lambda i, s, n: (i, 0))
    w_spec = pl.BlockSpec((1, C), lambda i, s, n: (0, 0))
    emb_spec = pl.BlockSpec((bt, D), lambda i, s, n: (i, 0))

    grid_spec = pltpu.PrefetchScalarGridSpec(
        num_scalar_prefetch=2,
        grid=(num_blocks,),
        in_specs=[
            row_spec, row_spec, row_spec, row_spec, w_spec,   # logit path
            row_spec, row_spec, row_spec, row_spec, w_spec,   # prob path
            emb_spec, emb_spec,                               # embeddings
            pl.BlockSpec((bt, 1), lambda i, s, n: (i, 0)),    # pair distance target
        ],
        out_specs=pl.BlockSpec((1, 1, _LANES), lambda i, s, n: (i, 0, 0)),
    )

    partials = pl.pallas_call(
        _ontological_loss_kernel,
        out_shape=jax.ShapeDtypeStruct((num_blocks, 1, _LANES), jnp.float32),
        grid_spec=grid_spec,
        compiler_params=pltpu.CompilerParams(
            dimension_semantics=("parallel",),
            vmem_limit_bytes=vmem_limit),
    )(scales, nrows,
      o11, t11, o21, t21, w1m1,
      o12, t12, o22, t22, w2,
      emb1, emb2, pair)

    return jnp.sum(partials)


def _reference_loss(out, targets, pair_type, l1, l2, l3, w1, w2):
    """Plain-JAX replica of the PyTorch forward, for verification."""
    emb1, emb2, o11, o12, o21, o22 = [jnp.asarray(a, jnp.float32) for a in out]
    t11, t12, t21, t22 = [jnp.asarray(a, jnp.float32) for a in targets]
    w1 = jnp.asarray(w1, jnp.float32)
    w2 = jnp.asarray(w2, jnp.float32)
    pt = jnp.asarray(pair_type, jnp.float32)

    def bce(x, y, pw):
        sp = jnp.maximum(-x, 0.0) + jnp.log1p(jnp.exp(-jnp.abs(x)))
        return jnp.mean((1.0 - y) * x + (1.0 + (pw - 1.0) * y) * sp)

    L1_1 = bce(o11, t11, w1)
    L1_2 = bce(o21, t21, w1)
    L2_1 = bce(-jnp.log(1.0 / o12 - 1.0), t12, w2)
    L2_2 = bce(-jnp.log(1.0 / o22 - 1.0), t22, w2)
    d_w = (jnp.sqrt(jnp.sum((emb1 - emb2) ** 2, axis=1)) - pt) ** 2
    loss = l1 * (L1_1 + L1_2) + l2 * (L2_1 + L2_2) + l3 * d_w
    return loss.mean()


def _make_inputs(key, B, C, D):
    ks = jax.random.split(key, 12)
    emb1 = jax.random.normal(ks[0], (B, D), jnp.float32)
    emb2 = jax.random.normal(ks[1], (B, D), jnp.float32)
    out1_1 = jax.random.normal(ks[2], (B, C), jnp.float32)
    out2_1 = jax.random.normal(ks[3], (B, C), jnp.float32)
    # out*_2 are sigmoid probabilities in (0, 1)
    out1_2 = jax.nn.sigmoid(jax.random.normal(ks[4], (B, C), jnp.float32))
    out2_2 = jax.nn.sigmoid(jax.random.normal(ks[5], (B, C), jnp.float32))
    t1_1 = jax.random.bernoulli(ks[6], 0.3, (B, C)).astype(jnp.float32)
    t1_2 = jax.random.bernoulli(ks[7], 0.3, (B, C)).astype(jnp.float32)
    t2_1 = jax.random.bernoulli(ks[8], 0.3, (B, C)).astype(jnp.float32)
    t2_2 = jax.random.bernoulli(ks[9], 0.3, (B, C)).astype(jnp.float32)
    ont_vals = jnp.array([0.0, 5.0, 10.0], jnp.float32)   # ontology_targets
    pair_type = ont_vals[jax.random.randint(ks[10], (B,), 0, 3)]
    return (emb1, emb2, out1_1, out1_2, out2_1, out2_2), \
           (t1_1, t1_2, t2_1, t2_2), pair_type


if __name__ == "__main__":
    key = jax.random.PRNGKey(0)
    C, D = 16, 32                       # num classes, embedding dim
    weights_1 = 1.0 + 0.1 * jnp.arange(C, dtype=jnp.float32)
    weights_2 = 2.0 - 0.05 * jnp.arange(C, dtype=jnp.float32)
    lambda1, lambda2, lambda3 = 0.5, 0.3, 0.2

    k1, k2 = jax.random.split(key)
    # B=8: single aligned block.  B=12: cdiv grid with a ragged, row-masked
    # last block (exercises the multi-block / megacore path).
    for sub_key, B in ((k1, 8), (k2, 12)):
        out_tuple, tgt_tuple, pair_type = _make_inputs(sub_key, B, C, D)

        loss = ontological_loss(out_tuple, tgt_tuple, pair_type,
                                lambda1, lambda2, lambda3, weights_1, weights_2)
        loss = jax.block_until_ready(loss)

        ref = _reference_loss(out_tuple, tgt_tuple, pair_type,
                              lambda1, lambda2, lambda3, weights_1, weights_2)
        ref = jax.block_until_ready(ref)

        assert jnp.allclose(loss, ref, rtol=1e-5, atol=1e-5), (B, loss, ref)

    print("KERNEL_OK")
</pallas_src>

<mosaic_0001>
module attributes {stable_mosaic.version = 11 : i64} {
  func.func @_ontological_loss_kernel(%arg0: i32, %arg1: memref<3xf32, #tpu.memory_space<smem>>, %arg2: memref<1xi32, #tpu.memory_space<smem>>, %arg3: memref<8x16xf32, #tpu.memory_space<vmem>>, %arg4: memref<8x16xf32, #tpu.memory_space<vmem>>, %arg5: memref<8x16xf32, #tpu.memory_space<vmem>>, %arg6: memref<8x16xf32, #tpu.memory_space<vmem>>, %arg7: memref<1x16xf32, #tpu.memory_space<vmem>>, %arg8: memref<8x16xf32, #tpu.memory_space<vmem>>, %arg9: memref<8x16xf32, #tpu.memory_space<vmem>>, %arg10: memref<8x16xf32, #tpu.memory_space<vmem>>, %arg11: memref<8x16xf32, #tpu.memory_space<vmem>>, %arg12: memref<1x16xf32, #tpu.memory_space<vmem>>, %arg13: memref<8x32xf32, #tpu.memory_space<vmem>>, %arg14: memref<8x32xf32, #tpu.memory_space<vmem>>, %arg15: memref<8x1xf32, #tpu.memory_space<vmem>>, %arg16: memref<1x1x128xf32, #tpu.memory_space<vmem>>) attributes {dimension_semantics = [#tpu.dimension_semantics<parallel>], iteration_bounds = array<i64: 1>, scalar_prefetch = 2 : i64, scratch_operands = 0 : i64, tpu.core_type = #tpu.core_type<tc>, window_params = [{transform_indices = @transform_0, window_bounds = array<i64: 8, 16>}, {transform_indices = @transform_1, window_bounds = array<i64: 8, 16>}, {transform_indices = @transform_2, window_bounds = array<i64: 8, 16>}, {transform_indices = @transform_3, window_bounds = array<i64: 8, 16>}, {pipeline_mode = #tpu.pipeline_mode<synchronous>, transform_indices = @transform_4, window_bounds = array<i64: 1, 16>}, {transform_indices = @transform_5, window_bounds = array<i64: 8, 16>}, {transform_indices = @transform_6, window_bounds = array<i64: 8, 16>}, {transform_indices = @transform_7, window_bounds = array<i64: 8, 16>}, {transform_indices = @transform_8, window_bounds = array<i64: 8, 16>}, {pipeline_mode = #tpu.pipeline_mode<synchronous>, transform_indices = @transform_9, window_bounds = array<i64: 1, 16>}, {transform_indices = @transform_10, window_bounds = array<i64: 8, 32>}, {transform_indices = @transform_11, window_bounds = array<i64: 8, 32>}, {transform_indices = @transform_12, window_bounds = array<i64: 8, 1>}, {transform_indices = @transform_13, window_bounds = array<i64: 1, 1, 128>}]} {
    %c0 = arith.constant 0 : index
    %0 = memref.load %arg1[%c0] : memref<3xf32, #tpu.memory_space<smem>>
    %c1 = arith.constant 1 : index
    %1 = memref.load %arg1[%c1] : memref<3xf32, #tpu.memory_space<smem>>
    %c2 = arith.constant 2 : index
    %2 = memref.load %arg1[%c2] : memref<3xf32, #tpu.memory_space<smem>>
    %c0_0 = arith.constant 0 : index
    %3 = memref.load %arg2[%c0_0] : memref<1xi32, #tpu.memory_space<smem>>
    %c8_i32 = arith.constant 8 : i32
    %4 = arith.muli %arg0, %c8_i32 : i32
    %5 = tpu.iota {dimensions = array<i32: 0>} : vector<8x1xi32>
    %6 = vector.broadcast %4 : i32 to vector<8x1xi32>
    %7 = arith.addi %5, %6 : vector<8x1xi32>
    %8 = vector.broadcast %3 : i32 to vector<8x1xi32>
    %9 = arith.cmpi slt, %7, %8 : vector<8x1xi32>
    %c0_1 = arith.constant 0 : index
    %c0_2 = arith.constant 0 : index
    %10 = vector.load %arg7[%c0_1, %c0_2] : memref<1x16xf32, #tpu.memory_space<vmem>>, vector<1x16xf32>
    %c0_3 = arith.constant 0 : index
    %c0_4 = arith.constant 0 : index
    %11 = vector.load %arg12[%c0_3, %c0_4] : memref<1x16xf32, #tpu.memory_space<vmem>>, vector<1x16xf32>
    %c0_5 = arith.constant 0 : index
    %c0_6 = arith.constant 0 : index
    %12 = vector.load %arg3[%c0_5, %c0_6] : memref<8x16xf32, #tpu.memory_space<vmem>>, vector<8x16xf32>
    %c0_7 = arith.constant 0 : index
    %c0_8 = arith.constant 0 : index
    %13 = vector.load %arg4[%c0_7, %c0_8] : memref<8x16xf32, #tpu.memory_space<vmem>>, vector<8x16xf32>
    %cst = arith.constant 0.000000e+00 : f32
    %14 = vector.broadcast %cst : f32 to vector<8x16xf32>
    %15 = arith.subf %14, %12 : vector<8x16xf32>
    %cst_9 = arith.constant 0.000000e+00 : f32
    %16 = vector.broadcast %cst_9 : f32 to vector<8x16xf32>
    %17 = arith.maximumf %15, %16 : vector<8x16xf32>
    %18 = math.absf %12 : vector<8x16xf32>
    %cst_10 = arith.constant 0.000000e+00 : f32
    %19 = vector.broadcast %cst_10 : f32 to vector<8x16xf32>
    %20 = arith.subf %19, %18 : vector<8x16xf32>
    %21 = math.exp %20 : vector<8x16xf32>
    %22 = math.log1p %21 : vector<8x16xf32>
    %23 = arith.addf %17, %22 : vector<8x16xf32>
    %cst_11 = arith.constant 1.000000e+00 : f32
    %24 = vector.broadcast %cst_11 : f32 to vector<8x16xf32>
    %25 = arith.subf %24, %13 : vector<8x16xf32>
    %26 = arith.mulf %25, %12 : vector<8x16xf32>
    %27 = vector.broadcast %10 : vector<1x16xf32> to vector<8x16xf32>
    %28 = arith.mulf %27, %13 : vector<8x16xf32>
    %cst_12 = arith.constant 1.000000e+00 : f32
    %29 = vector.broadcast %cst_12 : f32 to vector<8x16xf32>
    %30 = arith.addf %29, %28 : vector<8x16xf32>
    %31 = arith.mulf %30, %23 : vector<8x16xf32>
    %32 = arith.addf %26, %31 : vector<8x16xf32>
    %cst_13 = arith.constant 0.000000e+00 : f32
    %33 = vector.shape_cast %9 : vector<8x1xi1> to vector<8x1xi1>
    %34 = vector.broadcast %33 : vector<8x1xi1> to vector<8x16xi1>
    %35 = vector.broadcast %cst_13 : f32 to vector<8x16xf32>
    %36 = arith.select %34, %32, %35 : vector<8x16xi1>, vector<8x16xf32>
    %37 = vector.shape_cast %36 : vector<8x16xf32> to vector<1x8x16xf32>
    %cst_14 = arith.constant dense<0.000000e+00> : vector<1xf32>
    %38 = vector.multi_reduction <add>, %37, %cst_14 [1, 2] : vector<1x8x16xf32> to vector<1xf32>
    %39 = vector.shape_cast %38 : vector<1xf32> to vector<1x1x1xf32>
    %40 = vector.extract %39[0, 0, 0] : f32 from vector<1x1x1xf32>
    %c0_15 = arith.constant 0 : index
    %c0_16 = arith.constant 0 : index
    %41 = vector.load %arg5[%c0_15, %c0_16] : memref<8x16xf32, #tpu.memory_space<vmem>>, vector<8x16xf32>
    %c0_17 = arith.constant 0 : index
    %c0_18 = arith.constant 0 : index
    %42 = vector.load %arg6[%c0_17, %c0_18] : memref<8x16xf32, #tpu.memory_space<vmem>>, vector<8x16xf32>
    %cst_19 = arith.constant 0.000000e+00 : f32
    %43 = vector.broadcast %cst_19 : f32 to vector<8x16xf32>
    %44 = arith.subf %43, %41 : vector<8x16xf32>
    %cst_20 = arith.constant 0.000000e+00 : f32
    %45 = vector.broadcast %cst_20 : f32 to vector<8x16xf32>
    %46 = arith.maximumf %44, %45 : vector<8x16xf32>
    %47 = math.absf %41 : vector<8x16xf32>
    %cst_21 = arith.constant 0.000000e+00 : f32
    %48 = vector.broadcast %cst_21 : f32 to vector<8x16xf32>
    %49 = arith.subf %48, %47 : vector<8x16xf32>
    %50 = math.exp %49 : vector<8x16xf32>
    %51 = math.log1p %50 : vector<8x16xf32>
    %52 = arith.addf %46, %51 : vector<8x16xf32>
    %cst_22 = arith.constant 1.000000e+00 : f32
    %53 = vector.broadcast %cst_22 : f32 to vector<8x16xf32>
    %54 = arith.subf %53, %42 : vector<8x16xf32>
    %55 = arith.mulf %54, %41 : vector<8x16xf32>
    %56 = vector.broadcast %10 : vector<1x16xf32> to vector<8x16xf32>
    %57 = arith.mulf %56, %42 : vector<8x16xf32>
    %cst_23 = arith.constant 1.000000e+00 : f32
    %58 = vector.broadcast %cst_23 : f32 to vector<8x16xf32>
    %59 = arith.addf %58, %57 : vector<8x16xf32>
    %60 = arith.mulf %59, %52 : vector<8x16xf32>
    %61 = arith.addf %55, %60 : vector<8x16xf32>
    %cst_24 = arith.constant 0.000000e+00 : f32
    %62 = vector.shape_cast %9 : vector<8x1xi1> to vector<8x1xi1>
    %63 = vector.broadcast %62 : vector<8x1xi1> to vector<8x16xi1>
    %64 = vector.broadcast %cst_24 : f32 to vector<8x16xf32>
    %65 = arith.select %63, %61, %64 : vector<8x16xi1>, vector<8x16xf32>
    %66 = vector.shape_cast %65 : vector<8x16xf32> to vector<1x8x16xf32>
    %cst_25 = arith.constant dense<0.000000e+00> : vector<1xf32>
    %67 = vector.multi_reduction <add>, %66, %cst_25 [1, 2] : vector<1x8x16xf32> to vector<1xf32>
    %68 = vector.shape_cast %67 : vector<1xf32> to vector<1x1x1xf32>
    %69 = vector.extract %68[0, 0, 0] : f32 from vector<1x1x1xf32>
    %70 = arith.addf %40, %69 : f32
    %c0_26 = arith.constant 0 : index
    %c0_27 = arith.constant 0 : index
    %71 = vector.load %arg8[%c0_26, %c0_27] : memref<8x16xf32, #tpu.memory_space<vmem>>, vector<8x16xf32>
    %cst_28 = arith.constant 1.000000e-07 : f32
    %cst_29 = arith.constant 0.99999988 : f32
    %72 = vector.broadcast %cst_28 : f32 to vector<8x16xf32>
    %73 = arith.maximumf %72, %71 : vector<8x16xf32>
    %74 = vector.broadcast %cst_29 : f32 to vector<8x16xf32>
    %75 = arith.minimumf %74, %73 : vector<8x16xf32>
    %c0_30 = arith.constant 0 : index
    %c0_31 = arith.constant 0 : index
    %76 = vector.load %arg9[%c0_30, %c0_31] : memref<8x16xf32, #tpu.memory_space<vmem>>, vector<8x16xf32>
    %77 = vector.broadcast %11 : vector<1x16xf32> to vector<8x16xf32>
    %78 = arith.mulf %77, %76 : vector<8x16xf32>
    %cst_32 = arith.constant 0.000000e+00 : f32
    %79 = vector.broadcast %cst_32 : f32 to vector<8x16xf32>
    %80 = arith.subf %79, %78 : vector<8x16xf32>
    %81 = math.log %75 : vector<8x16xf32>
    %82 = arith.mulf %80, %81 : vector<8x16xf32>
    %cst_33 = arith.constant 1.000000e+00 : f32
    %83 = vector.broadcast %cst_33 : f32 to vector<8x16xf32>
    %84 = arith.subf %83, %76 : vector<8x16xf32>
    %cst_34 = arith.constant 0.000000e+00 : f32
    %85 = vector.broadcast %cst_34 : f32 to vector<8x16xf32>
    %86 = arith.subf %85, %75 : vector<8x16xf32>
    %87 = math.log1p %86 : vector<8x16xf32>
    %88 = arith.mulf %84, %87 : vector<8x16xf32>
    %89 = arith.subf %82, %88 : vector<8x16xf32>
    %cst_35 = arith.constant 0.000000e+00 : f32
    %90 = vector.shape_cast %9 : vector<8x1xi1> to vector<8x1xi1>
    %91 = vector.broadcast %90 : vector<8x1xi1> to vector<8x16xi1>
    %92 = vector.broadcast %cst_35 : f32 to vector<8x16xf32>
    %93 = arith.select %91, %89, %92 : vector<8x16xi1>, vector<8x16xf32>
    %94 = vector.shape_cast %93 : vector<8x16xf32> to vector<1x8x16xf32>
    %cst_36 = arith.constant dense<0.000000e+00> : vector<1xf32>
    %95 = vector.multi_reduction <add>, %94, %cst_36 [1, 2] : vector<1x8x16xf32> to vector<1xf32>
    %96 = vector.shape_cast %95 : vector<1xf32> to vector<1x1x1xf32>
    %97 = vector.extract %96[0, 0, 0] : f32 from vector<1x1x1xf32>
    %c0_37 = arith.constant 0 : index
    %c0_38 = arith.constant 0 : index
    %98 = vector.load %arg10[%c0_37, %c0_38] : memref<8x16xf32, #tpu.memory_space<vmem>>, vector<8x16xf32>
    %cst_39 = arith.constant 1.000000e-07 : f32
    %cst_40 = arith.constant 0.99999988 : f32
    %99 = vector.broadcast %cst_39 : f32 to vector<8x16xf32>
    %100 = arith.maximumf %99, %98 : vector<8x16xf32>
    %101 = vector.broadcast %cst_40 : f32 to vector<8x16xf32>
    %102 = arith.minimumf %101, %100 : vector<8x16xf32>
    %c0_41 = arith.constant 0 : index
    %c0_42 = arith.constant 0 : index
    %103 = vector.load %arg11[%c0_41, %c0_42] : memref<8x16xf32, #tpu.memory_space<vmem>>, vector<8x16xf32>
    %104 = vector.broadcast %11 : vector<1x16xf32> to vector<8x16xf32>
    %105 = arith.mulf %104, %103 : vector<8x16xf32>
    %cst_43 = arith.constant 0.000000e+00 : f32
    %106 = vector.broadcast %cst_43 : f32 to vector<8x16xf32>
    %107 = arith.subf %106, %105 : vector<8x16xf32>
    %108 = math.log %102 : vector<8x16xf32>
    %109 = arith.mulf %107, %108 : vector<8x16xf32>
    %cst_44 = arith.constant 1.000000e+00 : f32
    %110 = vector.broadcast %cst_44 : f32 to vector<8x16xf32>
    %111 = arith.subf %110, %103 : vector<8x16xf32>
    %cst_45 = arith.constant 0.000000e+00 : f32
    %112 = vector.broadcast %cst_45 : f32 to vector<8x16xf32>
    %113 = arith.subf %112, %102 : vector<8x16xf32>
    %114 = math.log1p %113 : vector<8x16xf32>
    %115 = arith.mulf %111, %114 : vector<8x16xf32>
    %116 = arith.subf %109, %115 : vector<8x16xf32>
    %cst_46 = arith.constant 0.000000e+00 : f32
    %117 = vector.shape_cast %9 : vector<8x1xi1> to vector<8x1xi1>
    %118 = vector.broadcast %117 : vector<8x1xi1> to vector<8x16xi1>
    %119 = vector.broadcast %cst_46 : f32 to vector<8x16xf32>
    %120 = arith.select %118, %116, %119 : vector<8x16xi1>, vector<8x16xf32>
    %121 = vector.shape_cast %120 : vector<8x16xf32> to vector<1x8x16xf32>
    %cst_47 = arith.constant dense<0.000000e+00> : vector<1xf32>
    %122 = vector.multi_reduction <add>, %121, %cst_47 [1, 2] : vector<1x8x16xf32> to vector<1xf32>
    %123 = vector.shape_cast %122 : vector<1xf32> to vector<1x1x1xf32>
    %124 = vector.extract %123[0, 0, 0] : f32 from vector<1x1x1xf32>
    %125 = arith.addf %97, %124 : f32
    %c0_48 = arith.constant 0 : index
    %c0_49 = arith.constant 0 : index
    %126 = vector.load %arg13[%c0_48, %c0_49] : memref<8x32xf32, #tpu.memory_space<vmem>>, vector<8x32xf32>
    %c0_50 = arith.constant 0 : index
    %c0_51 = arith.constant 0 : index
    %127 = vector.load %arg14[%c0_50, %c0_51] : memref<8x32xf32, #tpu.memory_space<vmem>>, vector<8x32xf32>
    %128 = arith.subf %126, %127 : vector<8x32xf32>
    %129 = arith.mulf %128, %128 : vector<8x32xf32>
    %cst_52 = arith.constant dense<0.000000e+00> : vector<8xf32>
    %130 = vector.multi_reduction <add>, %129, %cst_52 [1] : vector<8x32xf32> to vector<8xf32>
    %131 = vector.shape_cast %130 : vector<8xf32> to vector<8x1xf32>
    %132 = math.sqrt %131 : vector<8x1xf32>
    %c0_53 = arith.constant 0 : index
    %c0_54 = arith.constant 0 : index
    %133 = vector.load %arg15[%c0_53, %c0_54] : memref<8x1xf32, #tpu.memory_space<vmem>>, vector<8x1xf32>
    %134 = arith.subf %132, %133 : vector<8x1xf32>
    %135 = arith.mulf %134, %134 : vector<8x1xf32>
    %cst_55 = arith.constant 0.000000e+00 : f32
    %136 = vector.broadcast %cst_55 : f32 to vector<8x1xf32>
    %137 = arith.select %9, %135, %136 : vector<8x1xi1>, vector<8x1xf32>
    %138 = vector.shape_cast %137 : vector<8x1xf32> to vector<1x8x1xf32>
    %cst_56 = arith.constant dense<0.000000e+00> : vector<1xf32>
    %139 = vector.multi_reduction <add>, %138, %cst_56 [1, 2] : vector<1x8x1xf32> to vector<1xf32>
    %140 = vector.shape_cast %139 : vector<1xf32> to vector<1x1x1xf32>
    %141 = vector.extract %140[0, 0, 0] : f32 from vector<1x1x1xf32>
    %142 = arith.mulf %0, %70 : f32
    %143 = arith.mulf %1, %125 : f32
    %144 = arith.addf %142, %143 : f32
    %145 = arith.mulf %2, %141 : f32
    %146 = arith.addf %144, %145 : f32
    %cst_57 = arith.constant 7.812500e-03 : f32
    %147 = arith.mulf %146, %cst_57 : f32
    %148 = vector.broadcast %147 : f32 to vector<1x1x128xf32>
    %c0_58 = arith.constant 0 : index
    %c0_59 = arith.constant 0 : index
    %c0_60 = arith.constant 0 : index
    %149 = vector.load %arg16[%c0_58, %c0_59, %c0_60] : memref<1x1x128xf32, #tpu.memory_space<vmem>>, vector<1x1x128xf32>
    tpu.vector_store %arg16[%c0_58, %c0_59, %c0_60], %148 {strides = array<i32>} : memref<1x1x128xf32, #tpu.memory_space<vmem>>, vector<1x1x128xf32>,
    return
  }
  func.func @transform_0(%arg0: i32, %arg1: memref<3xf32, #tpu.memory_space<smem>>, %arg2: memref<1xi32, #tpu.memory_space<smem>>) -> (i32, i32) {
    %c0_i32 = arith.constant 0 : i32
    %c0_i32_0 = arith.constant 0 : i32
    return %arg0, %c0_i32 : i32, i32
  }
  func.func @transform_1(%arg0: i32, %arg1: memref<3xf32, #tpu.memory_space<smem>>, %arg2: memref<1xi32, #tpu.memory_space<smem>>) -> (i32, i32) {
    %c0_i32 = arith.constant 0 : i32
    %c0_i32_0 = arith.constant 0 : i32
    return %arg0, %c0_i32 : i32, i32
  }
  func.func @transform_2(%arg0: i32, %arg1: memref<3xf32, #tpu.memory_space<smem>>, %arg2: memref<1xi32, #tpu.memory_space<smem>>) -> (i32, i32) {
    %c0_i32 = arith.constant 0 : i32
    %c0_i32_0 = arith.constant 0 : i32
    return %arg0, %c0_i32 : i32, i32
  }
  func.func @transform_3(%arg0: i32, %arg1: memref<3xf32, #tpu.memory_space<smem>>, %arg2: memref<1xi32, #tpu.memory_space<smem>>) -> (i32, i32) {
    %c0_i32 = arith.constant 0 : i32
    %c0_i32_0 = arith.constant 0 : i32
    return %arg0, %c0_i32 : i32, i32
  }
  func.func @transform_4(%arg0: i32, %arg1: memref<3xf32, #tpu.memory_space<smem>>, %arg2: memref<1xi32, #tpu.memory_space<smem>>) -> (i32, i32) {
    %c0_i32 = arith.constant 0 : i32
    %c0_i32_0 = arith.constant 0 : i32
    %c0_i32_1 = arith.constant 0 : i32
    return %c0_i32, %c0_i32_0 : i32, i32
  }
  func.func @transform_5(%arg0: i32, %arg1: memref<3xf32, #tpu.memory_space<smem>>, %arg2: memref<1xi32, #tpu.memory_space<smem>>) -> (i32, i32) {
    %c0_i32 = arith.constant 0 : i32
    %c0_i32_0 = arith.constant 0 : i32
    return %arg0, %c0_i32 : i32, i32
  }
  func.func @transform_6(%arg0: i32, %arg1: memref<3xf32, #tpu.memory_space<smem>>, %arg2: memref<1xi32, #tpu.memory_space<smem>>) -> (i32, i32) {
    %c0_i32 = arith.constant 0 : i32
    %c0_i32_0 = arith.constant 0 : i32
    return %arg0, %c0_i32 : i32, i32
  }
  func.func @transform_7(%arg0: i32, %arg1: memref<3xf32, #tpu.memory_space<smem>>, %arg2: memref<1xi32, #tpu.memory_space<smem>>) -> (i32, i32) {
    %c0_i32 = arith.constant 0 : i32
    %c0_i32_0 = arith.constant 0 : i32
    return %arg0, %c0_i32 : i32, i32
  }
  func.func @transform_8(%arg0: i32, %arg1: memref<3xf32, #tpu.memory_space<smem>>, %arg2: memref<1xi32, #tpu.memory_space<smem>>) -> (i32, i32) {
    %c0_i32 = arith.constant 0 : i32
    %c0_i32_0 = arith.constant 0 : i32
    return %arg0, %c0_i32 : i32, i32
  }
  func.func @transform_9(%arg0: i32, %arg1: memref<3xf32, #tpu.memory_space<smem>>, %arg2: memref<1xi32, #tpu.memory_space<smem>>) -> (i32, i32) {
    %c0_i32 = arith.constant 0 : i32
    %c0_i32_0 = arith.constant 0 : i32
    %c0_i32_1 = arith.constant 0 : i32
    return %c0_i32, %c0_i32_0 : i32, i32
  }
  func.func @transform_10(%arg0: i32, %arg1: memref<3xf32, #tpu.memory_space<smem>>, %arg2: memref<1xi32, #tpu.memory_space<smem>>) -> (i32, i32) {
    %c0_i32 = arith.constant 0 : i32
    %c0_i32_0 = arith.constant 0 : i32
    return %arg0, %c0_i32 : i32, i32
  }
  func.func @transform_11(%arg0: i32, %arg1: memref<3xf32, #tpu.memory_space<smem>>, %arg2: memref<1xi32, #tpu.memory_space<smem>>) -> (i32, i32) {
    %c0_i32 = arith.constant 0 : i32
    %c0_i32_0 = arith.constant 0 : i32
    return %arg0, %c0_i32 : i32, i32
  }
  func.func @transform_12(%arg0: i32, %arg1: memref<3xf32, #tpu.memory_space<smem>>, %arg2: memref<1xi32, #tpu.memory_space<smem>>) -> (i32, i32) {
    %c0_i32 = arith.constant 0 : i32
    %c0_i32_0 = arith.constant 0 : i32
    return %arg0, %c0_i32 : i32, i32
  }
  func.func @transform_13(%arg0: i32, %arg1: memref<3xf32, #tpu.memory_space<smem>>, %arg2: memref<1xi32, #tpu.memory_space<smem>>) -> (i32, i32, i32) {
    %c0_i32 = arith.constant 0 : i32
    %c0_i32_0 = arith.constant 0 : i32
    %c0_i32_1 = arith.constant 0 : i32
    return %arg0, %c0_i32, %c0_i32_0 : i32, i32, i32
  }
}

</mosaic_0001>

<llo_original>
// kernel: tpu_custom_call.1
$region0: #{tpu_custom_call.1}
  #allocation0 [shape = 'u32[]', space=smem, size = 0x4, offset = 0x4, fixed_abs, tag = 'smem constant byte address 0x4 - core index']
  #allocation1 [shape = 'u32[144,128]{1,0:T(1,128)}', space=vmem, size = 0x12000, scoped, tag = 'internal scratch']
  #allocation2 [shape = 's32[1]{0}', space=sflag, size = 0x4, scoped, tag = 'scoped memory for tpu_custom_call.1']
  #allocation3 [shape = 'u8[512]{0}', space=smem, size = 0x200, scoped, tag = 'prefetched SMEM operand 0']
  #allocation4 [shape = 's32[1]{0:T(128)S(6)}', space=smem, size = 0x200, scoped, tag = 'prefetched SMEM operand 1']
  %s0 = inlined_call_operand.hbm [shape: f32[3], index: 0, kind: input, shape index: {}]
  %s1 = inlined_call_operand.<no memory space> [shape: s32[1], index: 1, kind: input, shape index: {}]
  %s2 = inlined_call_operand.vmem [shape: f32[8,16], index: 2, kind: input, shape index: {}]
  %s3 = inlined_call_operand.vmem [shape: f32[8,16], index: 3, kind: input, shape index: {}]
  %s4 = inlined_call_operand.vmem [shape: f32[8,16], index: 4, kind: input, shape index: {}]
  %s5 = inlined_call_operand.hbm [shape: f32[8,16], index: 5, kind: input, shape index: {}]
  %s6 = inlined_call_operand.vmem [shape: f32[1,16], index: 6, kind: input, shape index: {}]
  %s7 = inlined_call_operand.vmem [shape: f32[8,16], index: 7, kind: input, shape index: {}]
  %s8 = inlined_call_operand.hbm [shape: f32[8,16], index: 8, kind: input, shape index: {}]
  %s9 = inlined_call_operand.vmem [shape: f32[8,16], index: 9, kind: input, shape index: {}]
  %s10 = inlined_call_operand.hbm [shape: f32[8,16], index: 10, kind: input, shape index: {}]
  %s11 = inlined_call_operand.vmem [shape: f32[1,16], index: 11, kind: input, shape index: {}]
  %s12 = inlined_call_operand.vmem [shape: f32[8,32], index: 12, kind: input, shape index: {}]
  %s13 = inlined_call_operand.vmem [shape: f32[8,32], index: 13, kind: input, shape index: {}]
  %s14 = inlined_call_operand.vmem [shape: f32[8,1], index: 14, kind: input, shape index: {}]
  %s15 = inlined_call_operand.hbm [shape: f32[1,1,128], index: 15, kind: output, shape index: {}]
  %s16 = sld [smem:[#allocation0]]
  $region74: #{tpu_custom_call.1} parent=0
    _
  %s18 = ssub.s32 1, %s16
  %s19 = scalar_select 0, %s18, %s16
  %21 = dma.hbm_to_smem %s0, 16, [#allocation3], [#allocation2]
  %22 = sst [smem:[#allocation4]] %s1
  %23 = dma.done [#allocation2], 16
  %24 = sfence
  $region1: #{tpu_custom_call.1} parent=0
    #allocation5 [shape = 'u8[4096]{0}', space=vmem, size = 0x1000, scoped, tag = 'input window, operand 5, single buffered']
    #allocation6 [shape = 's32[1]{0}', space=sflag, size = 0x4, scoped, tag = 'scoped memory for tpu_custom_call.1']
    #allocation7 [shape = 's32[1]{0}', space=sflag, size = 0x4, scoped, tag = 'scoped memory for tpu_custom_call.1']
    #allocation8 [shape = 'u8[4096]{0}', space=vmem, size = 0x1000, scoped, tag = 'input window, operand 8, single buffered']
    #allocation9 [shape = 's32[1]{0}', space=sflag, size = 0x4, scoped, tag = 'scoped memory for tpu_custom_call.1']
    #allocation10 [shape = 'u8[4096]{0}', space=vmem, size = 0x1000, scoped, tag = 'input window, operand 10, single buffered']
    #allocation11 [shape = 'u8[512]{0}', space=vmem, size = 0x400, scoped, tag = 'output window, operand 0, single buffered']
    %25 = vsyncpa [#allocation6], 0
    %26 = vsyncpa [#allocation9], 0
    %27 = vsyncpa [#allocation7], 0
    // Predicated region
    $region2: #{tpu_custom_call.1} parent=1 // pred_check
      _
    $region3: #{tpu_custom_call.1} parent=1 // pred_check_branch
      %29 = sbr.rel (0) target = $region5
    $region4: #{tpu_custom_call.1} parent=1 // pred_region
      _
    $region5: #{tpu_custom_call.1} parent=1 // pred_fallthru
      _
    // Predicated region
    $region6: #{tpu_custom_call.1} parent=1 // pred_check
      _
    $region7: #{tpu_custom_call.1} parent=1 // pred_check_branch
      %31 = sbr.rel (0) target = $region9
    $region8: #{tpu_custom_call.1} parent=1 // pred_region
      _
    $region9: #{tpu_custom_call.1} parent=1 // pred_fallthru
      _
    // Predicated region
    $region10: #{tpu_custom_call.1} parent=1 // pred_check
      _
    $region11: #{tpu_custom_call.1} parent=1 // pred_check_branch
      %33 = sbr.rel (0) target = $region13
    $region12: #{tpu_custom_call.1} parent=1 // pred_region
      _
    $region13: #{tpu_custom_call.1} parent=1 // pred_fallthru
      _
    // Predicated region
    $region14: #{tpu_custom_call.1} parent=1 // pred_check
      _
    $region15: #{tpu_custom_call.1} parent=1 // pred_check_branch
      %35 = sbr.rel (0) target = $region17
    $region16: #{tpu_custom_call.1} parent=1 // pred_region
      %s37 = ssub.s32 128, 128
      %38 = vsyncadd [#allocation6], %s37
      %s40 = sshll.u32 [#allocation5], 4
      %s41 = int_to_ptr.vmem [resolvable:$true] %s40
      %43 = dma.hbm_to_vmem [thread:$0]  %s5, 128, %s41, [#allocation6]
    $region17: #{tpu_custom_call.1} parent=1 // pred_fallthru
      _
    // Predicated region
    $region18: #{tpu_custom_call.1} parent=1 // pred_check
      _
    $region19: #{tpu_custom_call.1} parent=1 // pred_check_branch
      %45 = sbr.rel (0) target = $region21
    $region20: #{tpu_custom_call.1} parent=1 // pred_region
      _
    $region21: #{tpu_custom_call.1} parent=1 // pred_fallthru
      _
    // Predicated region
    $region22: #{tpu_custom_call.1} parent=1 // pred_check
      _
    $region23: #{tpu_custom_call.1} parent=1 // pred_check_branch
      %47 = sbr.rel (0) target = $region25
    $region24: #{tpu_custom_call.1} parent=1 // pred_region
      _
    $region25: #{tpu_custom_call.1} parent=1 // pred_fallthru
      _
    // Predicated region
    $region26: #{tpu_custom_call.1} parent=1 // pred_check
      _
    $region27: #{tpu_custom_call.1} parent=1 // pred_check_branch
      %49 = sbr.rel (0) target = $region29
    $region28: #{tpu_custom_call.1} parent=1 // pred_region
      %s51 = ssub.s32 128, 128
      %52 = vsyncadd [#allocation9], %s51
      %s54 = sshll.u32 [#allocation8], 4
      %s55 = int_to_ptr.vmem [resolvable:$true] %s54
      %57 = dma.hbm_to_vmem [thread:$0]  %s8, 128, %s55, [#allocation9]
    $region29: #{tpu_custom_call.1} parent=1 // pred_fallthru
      _
    // Predicated region
    $region30: #{tpu_custom_call.1} parent=1 // pred_check
      _
    $region31: #{tpu_custom_call.1} parent=1 // pred_check_branch
      %59 = sbr.rel (0) target = $region33
    $region32: #{tpu_custom_call.1} parent=1 // pred_region
      _
    $region33: #{tpu_custom_call.1} parent=1 // pred_fallthru
      _
    // Predicated region
    $region34: #{tpu_custom_call.1} parent=1 // pred_check
      _
    $region35: #{tpu_custom_call.1} parent=1 // pred_check_branch
      %61 = sbr.rel (0) target = $region37
    $region36: #{tpu_custom_call.1} parent=1 // pred_region
      %s63 = ssub.s32 128, 128
      %64 = vsyncadd [#allocation9], %s63
      %s66 = sshll.u32 [#allocation10], 4
      %s67 = int_to_ptr.vmem [resolvable:$true] %s66
      %69 = dma.hbm_to_vmem [thread:$0]  %s10, 128, %s67, [#allocation9]
    $region37: #{tpu_custom_call.1} parent=1 // pred_fallthru
      _
    // Predicated region
    $region38: #{tpu_custom_call.1} parent=1 // pred_check
      _
    $region39: #{tpu_custom_call.1} parent=1 // pred_check_branch
      %71 = sbr.rel (0) target = $region41
    $region40: #{tpu_custom_call.1} parent=1 // pred_region
      _
    $region41: #{tpu_custom_call.1} parent=1 // pred_fallthru
      _
    // Predicated region
    $region42: #{tpu_custom_call.1} parent=1 // pred_check
      _
    $region43: #{tpu_custom_call.1} parent=1 // pred_check_branch
      %73 = sbr.rel (0) target = $region45
    $region44: #{tpu_custom_call.1} parent=1 // pred_region
      _
    $region45: #{tpu_custom_call.1} parent=1 // pred_fallthru
      _
    // Predicated region
    $region46: #{tpu_custom_call.1} parent=1 // pred_check
      _
    $region47: #{tpu_custom_call.1} parent=1 // pred_check_branch
      %75 = sbr.rel (0) target = $region49
    $region48: #{tpu_custom_call.1} parent=1 // pred_region
      _
    $region49: #{tpu_custom_call.1} parent=1 // pred_fallthru
      _
    // Predicated region
    $region50: #{tpu_custom_call.1} parent=1 // pred_check
      _
    $region51: #{tpu_custom_call.1} parent=1 // pred_check_branch
      %77 = sbr.rel (0) target = $region53
    $region52: #{tpu_custom_call.1} parent=1 // pred_region
      _
    $region53: #{tpu_custom_call.1} parent=1 // pred_fallthru
      _
    // Predicated region
    $region54: #{tpu_custom_call.1} parent=1 // pred_check
      _
    $region55: #{tpu_custom_call.1} parent=1 // pred_check_branch
      %79 = sbr.rel (0) target = $region57
    $region56: #{tpu_custom_call.1} parent=1 // pred_region
      %80 = dma.done [#allocation6], 128
    $region57: #{tpu_custom_call.1} parent=1 // pred_fallthru
      _
    // Predicated region
    $region58: #{tpu_custom_call.1} parent=1 // pred_check
      _
    $region59: #{tpu_custom_call.1} parent=1 // pred_check_branch
      %82 = sbr.rel (0) target = $region61
    $region60: #{tpu_custom_call.1} parent=1 // pred_region
      %83 = dma.done [#allocation9], 128
    $region61: #{tpu_custom_call.1} parent=1 // pred_fallthru
      _
    // Predicated region
    $region62: #{tpu_custom_call.1} parent=1 // pred_check
      _
    $region63: #{tpu_custom_call.1} parent=1 // pred_check_branch
      %85 = sbr.rel (0) target = $region65
    $region64: #{tpu_custom_call.1} parent=1 // pred_region
      %86 = dma.done [#allocation9], 128
    $region65: #{tpu_custom_call.1} parent=1 // pred_fallthru
      _
    %s87 = sld [smem:[#allocation3]]
    %s88 = sld [smem:[#allocation3 + $0x1]]
    %s89 = sld [smem:[#allocation3 + $0x2]]
    %s90 = sld [smem:[#allocation4]]
    %s91 = smul.u32 0, 8
    %v92 = vlaneseq
    %v93 = vshrl.u32 %v92, 7
    %v94 = vstv %s91
    %v95 = vadd.s32 %v93, %v94
    %v96 = vstv %s90
    %vm97 = vcmp.lt.s32.totalorder %v95, %v96
    %v98 = vld [vmem:[%s6] sm:$0x1]
    %v99 = vld [vmem:[%s11] sm:$0x1]
    %v100 = vld [vmem:[%s2] sm:$0xff]
    %v101 = vld [vmem:[%s3] sm:$0xff]
    %v102 = vsub.f32 0.0, %v100
    %v103 = vmax.f32 %v102, 0.0
    %v104 = vand.u32 2147483647, %v100
    %v105 = vsub.f32 0.0, %v104
    %v106 = vmul.f32 %v105, 1.442695
    %v107 = vpow.pop %v106
    %v108 = vadd.f32 %v107, 1.0
    %v109 = vlog2.pop %v108
    %v110 = vmul.f32 %v109, 0.6931472
    %v111 = vmul.f32 -0.5, %v107
    %v112 = vadd.f32 %v111, 1.0
    %v113 = vmul.f32 %v112, %v107
    %v114 = vand.u32 2147483647, %v107
    %vm115 = vcmp.lt.f32.partialorder %v114, 0.0004427343
    %v116 = vsel %vm115, %v113, %v110
    %v117 = vadd.f32 %v103, %v116
    %v118 = vsub.f32 1.0, %v101
    %v119 = vmul.f32 %v118, %v100
    %v121 = vlaneseq
    %v122 = vshrl.u32 %v121, 7
    %v123 = vsub.s32 0, %v122
    %v124 = vrot.slane %v98, %v123
    %v126 = vmul.f32 %v124, %v101
    %v127 = vadd.f32 %v126, 1.0
    %v128 = vmul.f32 %v127, %v117
    %v129 = vadd.f32 %v119, %v128
    %v130 = vsel %vm97, 1, 0
    %vm131 = vcmp.eq.s32.totalorder %v130, 1
    %v132 = vsel %vm131, %v129, 0.0
    %vm133 = vcmask 130048
    %v134 = vsel %vm133, %v132, 0.0
    %135 = vadd.xlane.f32.xlu0 %v134
    %v136 = vpop.xlane.xlu0 %135
    %v137 = vrot.slane %v136, 4
    %v138 = vadd.f32 %v136, %v137
    %v139 = vrot.slane %v138, 2
    %v140 = vadd.f32 %v138, %v139
    %v141 = vrot.slane %v140, 1
    %v142 = vadd.f32 %v140, %v141
    %s143 = vtos %v142
    %v144 = vld [vmem:[%s4] sm:$0xff]
    %v145 = vld [vmem:[#allocation5] sm:$0xff]
    %v146 = vsub.f32 0.0, %v144
    %v147 = vmax.f32 %v146, 0.0
    %v148 = vand.u32 2147483647, %v144
    %v149 = vsub.f32 0.0, %v148
    %v150 = vmul.f32 %v149, 1.442695
    %v151 = vpow.pop %v150
    %v152 = vadd.f32 %v151, 1.0
    %v153 = vlog2.pop %v152
    %v154 = vmul.f32 %v153, 0.6931472
    %v155 = vmul.f32 -0.5, %v151
    %v156 = vadd.f32 %v155, 1.0
    %v157 = vmul.f32 %v156, %v151
    %v158 = vand.u32 2147483647, %v151
    %vm159 = vcmp.lt.f32.partialorder %v158, 0.0004427343
    %v160 = vsel %vm159, %v157, %v154
    %v161 = vadd.f32 %v147, %v160
    %v162 = vsub.f32 1.0, %v145
    %v163 = vmul.f32 %v162, %v144
    %v164 = vmul.f32 %v124, %v145
    %v165 = vadd.f32 %v164, 1.0
    %v166 = vmul.f32 %v165, %v161
    %v167 = vadd.f32 %v163, %v166
    %v168 = vsel %vm131, %v167, 0.0
    %v169 = vsel %vm133, %v168, 0.0
    %170 = vadd.xlane.f32.xlu0 %v169
    %v171 = vpop.xlane.xlu0 %170
    %v172 = vrot.slane %v171, 4
    %v173 = vadd.f32 %v171, %v172
    %v174 = vrot.slane %v173, 2
    %v175 = vadd.f32 %v173, %v174
    %v176 = vrot.slane %v175, 1
    %v177 = vadd.f32 %v175, %v176
    %s178 = vtos %v177
    %s179 = sadd.f32 %s143, %s178
    %v180 = vld [vmem:[%s7] sm:$0xff]
    %v181 = vmax.f32 %v180, 1e-07
    %v182 = vmin.f32 %v181, 0.9999999
    %v183 = vld [vmem:[#allocation8] sm:$0xff]
    %v185 = vlaneseq
    %v186 = vshrl.u32 %v185, 7
    %v187 = vsub.s32 0, %v186
    %v188 = vrot.slane %v99, %v187
    %v190 = vmul.f32 %v188, %v183
    %v191 = vsub.f32 0.0, %v190
    %v192 = vlog2.pop %v182
    %v193 = vmul.f32 %v192, 0.6931472
    %v194 = vmul.f32 %v191, %v193
    %v195 = vsub.f32 1.0, %v183
    %v196 = vsub.f32 0.0, %v182
    %v197 = vadd.f32 %v196, 1.0
    %v198 = vlog2.pop %v197
    %v199 = vmul.f32 %v198, 0.6931472
    %v200 = vmul.f32 -0.5, %v196
    %v201 = vadd.f32 %v200, 1.0
    %v202 = vmul.f32 %v201, %v196
    %v203 = vand.u32 2147483647, %v196
    %vm204 = vcmp.lt.f32.partialorder %v203, 0.0004427343
    %v205 = vsel %vm204, %v202, %v199
    %v206 = vmul.f32 %v195, %v205
    %v207 = vsub.f32 %v194, %v206
    %v208 = vsel %vm131, %v207, 0.0
    %v209 = vsel %vm133, %v208, 0.0
    %210 = vadd.xlane.f32.xlu0 %v209
    %v211 = vpop.xlane.xlu0 %210
    %v212 = vrot.slane %v211, 4
    %v213 = vadd.f32 %v211, %v212
    %v214 = vrot.slane %v213, 2
    %v215 = vadd.f32 %v213, %v214
    %v216 = vrot.slane %v215, 1
    %v217 = vadd.f32 %v215, %v216
    %s218 = vtos %v217
    %v219 = vld [vmem:[%s9] sm:$0xff]
    %v220 = vmax.f32 %v219, 1e-07
    %v221 = vmin.f32 %v220, 0.9999999
    %v222 = vld [vmem:[#allocation10] sm:$0xff]
    %v223 = vmul.f32 %v188, %v222
    %v224 = vsub.f32 0.0, %v223
    %v225 = vlog2.pop %v221
    %v226 = vmul.f32 %v225, 0.6931472
    %v227 = vmul.f32 %v224, %v226
    %v228 = vsub.f32 1.0, %v222
    %v229 = vsub.f32 0.0, %v221
    %v230 = vadd.f32 %v229, 1.0
    %v231 = vlog2.pop %v230
    %v232 = vmul.f32 %v231, 0.6931472
    %v233 = vmul.f32 -0.5, %v229
    %v234 = vadd.f32 %v233, 1.0
    %v235 = vmul.f32 %v234, %v229
    %v236 = vand.u32 2147483647, %v229
    %vm237 = vcmp.lt.f32.partialorder %v236, 0.0004427343
    %v238 = vsel %vm237, %v235, %v232
    %v239 = vmul.f32 %v228, %v238
    %v240 = vsub.f32 %v227, %v239
    %v241 = vsel %vm131, %v240, 0.0
    %v242 = vsel %vm133, %v241, 0.0
    %243 = vadd.xlane.f32.xlu0 %v242
    %v244 = vpop.xlane.xlu0 %243
    %v245 = vrot.slane %v244, 4
    %v246 = vadd.f32 %v244, %v245
    %v247 = vrot.slane %v246, 2
    %v248 = vadd.f32 %v246, %v247
    %v249 = vrot.slane %v248, 1
    %v250 = vadd.f32 %v248, %v249
    %s251 = vtos %v250
    %s252 = sadd.f32 %s218, %s251
    %v253 = vld [vmem:[%s12] sm:$0xff]
    %v254 = vld [vmem:[%s13] sm:$0xff]
    %v255 = vsub.f32 %v253, %v254
    %v256 = vmul.f32 %v255, %v255
    %vm257 = vcmask 261120
    %v258 = vsel %vm257, %v256, 0.0
    %259 = vadd.xlane.f32.xlu0 %v258
    %v260 = vpop.xlane.xlu0 %259
    %v261 = vrsqrt.pop %v260
    %v262 = vmul.f32 %v260, %v261
    %vm263 = vcmp.eq.f32.partialorder %v260, inf
    %v264 = vsel %vm263, %v260, %v262
    %vm265 = vcmp.eq.f32.partialorder %v260, 0.0
    %v266 = vand.u32 %v260, 2147483648
    %v267 = vsel %vm265, %v266, %v264
    %v268 = vld [vmem:[%s14] sm:$0xff]
    %v269 = vsub.f32 %v267, %v268
    %v270 = vmul.f32 %v269, %v269
    %v271 = vsel %vm97, %v270, 0.0
    %vm272 = vcmask 7168
    %v273 = vsel %vm272, %v271, 0.0
    %274 = vadd.xlane.f32.xlu0 %v273
    %v275 = vpop.xlane.xlu0 %274
    %v276 = vrot.slane %v275, 4
    %v277 = vadd.f32 %v275, %v276
    %v278 = vrot.slane %v277, 2
    %v279 = vadd.f32 %v277, %v278
    %v280 = vrot.slane %v279, 1
    %v281 = vadd.f32 %v279, %v280
    %s282 = vtos %v281
    %s283 = smul.f32 %s87, %s179
    %s284 = smul.f32 %s88, %s252
    %s285 = sadd.f32 %s283, %s284
    %s286 = smul.f32 %s89, %s282
    %s287 = sadd.f32 %s285, %s286
    %s288 = smul.f32 %s287, 0.0078125
    %v289 = vstv %s288
    %290 = vst [vmem:[#allocation11] sm:$0x1] %v289
    // Predicated region
    $region66: #{tpu_custom_call.1} parent=1 // pred_check
      _
    $region67: #{tpu_custom_call.1} parent=1 // pred_check_branch
      %292 = sbr.rel (0) target = $region69
    $region68: #{tpu_custom_call.1} parent=1 // pred_region
      %s294 = ssub.s32 16, 16
      %295 = vsyncadd [#allocation7], %s294
      %s297 = sshll.u32 [#allocation11], 4
      %s298 = int_to_ptr.vmem [resolvable:$true] %s297
      %300 = dma.vmem_to_hbm [thread:$0]  %s298, 16, %s15, [#allocation7]
    $region69: #{tpu_custom_call.1} parent=1 // pred_fallthru
      _
    // Predicated region
    $region70: #{tpu_custom_call.1} parent=1 // pred_check
      _
    $region71: #{tpu_custom_call.1} parent=1 // pred_check_branch
      %302 = sbr.rel (0) target = $region73
    $region72: #{tpu_custom_call.1} parent=1 // pred_region
      %303 = dma.done [#allocation7], 16
    $region73: #{tpu_custom_call.1} parent=1 // pred_fallthru
      _
    %304 = vsyncpa [#allocation6], 1
    %305 = vsyncpa [#allocation9], 1
    %306 = vsyncpa [#allocation7], 1

</llo_original>
